<compile_context>
chip_gen: v7x
topology: tpu7x:2x2x1
jax: 0.10.0
libtpu: 0.0.40
codegen_flags: <defaults>
</compile_context>

<pallas_src>
import jax
import jax.numpy as jnp
from jax.experimental import pallas as pl
from jax.experimental.pallas import tpu as pltpu


def _ctrl_kernel(z_ref, w_ref, b_ref, o_ref):
    # z: (B, K) f32, w: (N, K) bf16 (PyTorch layout), b: (1, N) f32.
    z_bf = z_ref[...].astype(jnp.bfloat16)
    # NT matmul on the MXU: contract K (dim 1 of both operands) -> (B, N),
    # accumulating in f32.
    y = jax.lax.dot_general(
        z_bf, w_ref[...],
        dimension_numbers=(((1,), (1,)), ((), ())),
        preferred_element_type=jnp.float32,
    )
    y = y + b_ref[...]                      # bias broadcast over batch rows (f32)
    o_ref[...] = jax.nn.sigmoid(y).astype(o_ref.dtype)


@jax.jit
def control_tensor_generator(z, weight_bf16, bias):
    """z: (B, K) f32; weight_bf16: (N, K) bf16 (PyTorch layout); bias: (N,) f32."""
    B, K = z.shape
    N = weight_bf16.shape[0]
    b2d = bias.reshape(1, N)                # keep >=2D for TPU layout

    return pl.pallas_call(
        _ctrl_kernel,
        out_shape=jax.ShapeDtypeStruct((B, N), z.dtype),
        in_specs=[
            pl.BlockSpec(memory_space=pltpu.MemorySpace.VMEM),
            pl.BlockSpec(memory_space=pltpu.MemorySpace.VMEM),
            pl.BlockSpec(memory_space=pltpu.MemorySpace.VMEM),
        ],
        out_specs=pl.BlockSpec(memory_space=pltpu.MemorySpace.VMEM),
    )(z, weight_bf16, b2d)


if __name__ == "__main__":
    control_dim = 64
    output_dim = 768
    batch = 8

    key = jax.random.PRNGKey(0)
    kz, kw, kb = jax.random.split(key, 3)

    # Deterministic parameter init mimicking nn.Linear's uniform(-1/sqrt(K), 1/sqrt(K)).
    bound = 1.0 / (control_dim ** 0.5)
    weight_f32 = jax.random.uniform(kw, (output_dim, control_dim), jnp.float32,
                                    minval=-bound, maxval=bound)
    bias = jax.random.uniform(kb, (output_dim,), jnp.float32,
                              minval=-bound, maxval=bound)

    # Store the parameter in bf16 once (no per-call cast / transpose).
    weight_bf16 = weight_f32.astype(jnp.bfloat16)

    z = jax.random.normal(kz, (batch, control_dim), jnp.float32)

    out = control_tensor_generator(z, weight_bf16, bias)
    out = jax.block_until_ready(out)
    assert out.shape == (batch, output_dim)

    # Reference 1: matched bf16-operand / f32-accumulate reference (tight tol).
    ref_bf = jax.nn.sigmoid(
        jax.lax.dot_general(
            z.astype(jnp.bfloat16), weight_bf16,
            dimension_numbers=(((1,), (1,)), ((), ())),
            preferred_element_type=jnp.float32,
        ) + bias
    )
    assert jnp.allclose(out, ref_bf, atol=1e-3, rtol=1e-3)

    # Reference 2: original full-f32 module semantics (loose tol due to bf16 weights).
    ref_f32 = jax.nn.sigmoid(z @ weight_f32.T + bias)
    assert jnp.allclose(out, ref_f32, atol=3e-2, rtol=3e-2)

    print("KERNEL_OK")
</pallas_src>

<mosaic_0001>
module attributes {stable_mosaic.version = 11 : i64} {
  func.func @_ctrl_kernel(%arg0: memref<8x64xf32, #tpu.memory_space<vmem>>, %arg1: memref<768x64xbf16, #tpu.memory_space<vmem>>, %arg2: memref<1x768xf32, #tpu.memory_space<vmem>>, %arg3: memref<8x768xf32, #tpu.memory_space<vmem>>) attributes {dimension_semantics = [], scalar_prefetch = 0 : i64, scratch_operands = 0 : i64, tpu.core_type = #tpu.core_type<tc>} {
    %c0 = arith.constant 0 : index
    %c0_0 = arith.constant 0 : index
    %0 = vector.load %arg0[%c0, %c0_0] : memref<8x64xf32, #tpu.memory_space<vmem>>, vector<8x64xf32>
    %1 = arith.truncf %0 : vector<8x64xf32> to vector<8x64xbf16>
    %c0_1 = arith.constant 0 : index
    %c0_2 = arith.constant 0 : index
    %2 = vector.load %arg1[%c0_1, %c0_2] : memref<768x64xbf16, #tpu.memory_space<vmem>>, vector<768x64xbf16>
    %cst = arith.constant dense<0.000000e+00> : vector<8x768xf32>
    %3 = tpu.matmul %1, %2, %cst {dimension_numbers = #tpu.dot_dimension_numbers<[1], [1], [0], [0], [0, 0, 1, 0], [], []>} : vector<8x64xbf16>, vector<768x64xbf16>, vector<8x768xf32> -> vector<8x768xf32>
    %c0_3 = arith.constant 0 : index
    %c0_4 = arith.constant 0 : index
    %4 = vector.load %arg2[%c0_3, %c0_4] : memref<1x768xf32, #tpu.memory_space<vmem>>, vector<1x768xf32>
    %5 = vector.broadcast %4 : vector<1x768xf32> to vector<8x768xf32>
    %6 = arith.addf %3, %5 : vector<8x768xf32>
    %7 = arith.negf %6 : vector<8x768xf32>
    %8 = math.exp %7 : vector<8x768xf32>
    %cst_5 = arith.constant 1.000000e+00 : f32
    %9 = vector.broadcast %cst_5 : f32 to vector<8x768xf32>
    %10 = arith.addf %9, %8 : vector<8x768xf32>
    %11 = arith.divf %9, %10 : vector<8x768xf32>
    %c0_6 = arith.constant 0 : index
    %c0_7 = arith.constant 0 : index
    %12 = vector.load %arg3[%c0_6, %c0_7] : memref<8x768xf32, #tpu.memory_space<vmem>>, vector<8x768xf32>
    tpu.vector_store %arg3[%c0_6, %c0_7], %11 {strides = array<i32>} : memref<8x768xf32, #tpu.memory_space<vmem>>, vector<8x768xf32>,
    return
  }
}

</mosaic_0001>

<llo_original>
// kernel: control_tensor_generator.1
$region0: #{control_tensor_generator.1}
  #allocation0 [shape = 'u32[]', space=smem, size = 0x4, offset = 0x4, fixed_abs, tag = 'smem constant byte address 0x4 - core index']
  #allocation1 [shape = 'u32[144,128]{1,0:T(1,128)}', space=vmem, size = 0x12000, scoped, tag = 'internal scratch']
  %s0 = inlined_call_operand.vmem [shape: f32[8,64], index: 0, kind: input, shape index: {}]
  %s1 = inlined_call_operand.vmem [shape: bf16[768,64], index: 1, kind: input, shape index: {}]
  %s2 = inlined_call_operand.vmem [shape: f32[1,768], index: 2, kind: input, shape index: {}]
  %s3 = inlined_call_operand.hbm [shape: f32[8,768], index: 3, kind: output, shape index: {}]
  %s4 = sld [smem:[#allocation0]]
  $region22: #{control_tensor_generator.1} parent=0
    _
  %s6 = ssub.s32 1, %s4
  %s7 = scalar_select 0, %s6, %s4
  $region1: #{control_tensor_generator.1} parent=0
    #allocation2 [shape = 'u8[24576]{0}', space=vmem, size = 0x6000, scoped, tag = 'output window, operand 0, single buffered']
    #allocation3 [shape = 's32[1]{0}', space=sflag, size = 0x4, scoped, tag = 'scoped memory for control_tensor_generator.1']
    %8 = vsyncpa [#allocation3], 0
    // Predicated region
    $region2: #{control_tensor_generator.1} parent=1 // pred_check
      _
    $region3: #{control_tensor_generator.1} parent=1 // pred_check_branch
      %10 = sbr.rel (0) target = $region5
    $region4: #{control_tensor_generator.1} parent=1 // pred_region
      _
    $region5: #{control_tensor_generator.1} parent=1 // pred_fallthru
      _
    // Predicated region
    $region6: #{control_tensor_generator.1} parent=1 // pred_check
      _
    $region7: #{control_tensor_generator.1} parent=1 // pred_check_branch
      %12 = sbr.rel (0) target = $region9
    $region8: #{control_tensor_generator.1} parent=1 // pred_region
      _
    $region9: #{control_tensor_generator.1} parent=1 // pred_fallthru
      _
    // Predicated region
    $region10: #{control_tensor_generator.1} parent=1 // pred_check
      _
    $region11: #{control_tensor_generator.1} parent=1 // pred_check_branch
      %14 = sbr.rel (0) target = $region13
    $region12: #{control_tensor_generator.1} parent=1 // pred_region
      _
    $region13: #{control_tensor_generator.1} parent=1 // pred_fallthru
      _
    %v16 = vld [vmem:[%s0] sm:$0xff]
    %v17 = vpack.c.bf16 %v16, %v16
    %v18 = vld [vmem:[%s1] sm:$0xf]
    %v19 = vld [vmem:[%s1 + $0x4] sm:$0xf]
    %v20 = vld [vmem:[%s1 + $0x8] sm:$0xf]
    %v21 = vld [vmem:[%s1 + $0xc] sm:$0xf]
    %v22 = vld [vmem:[%s1 + $0x10] sm:$0xf]
    %v23 = vld [vmem:[%s1 + $0x14] sm:$0xf]
    %v24 = vld [vmem:[%s1 + $0x18] sm:$0xf]
    %v25 = vld [vmem:[%s1 + $0x1c] sm:$0xf]
    %v26 = vld [vmem:[%s1 + $0x20] sm:$0xf]
    %v27 = vld [vmem:[%s1 + $0x24] sm:$0xf]
    %v28 = vld [vmem:[%s1 + $0x28] sm:$0xf]
    %v29 = vld [vmem:[%s1 + $0x2c] sm:$0xf]
    %v30 = vld [vmem:[%s1 + $0x30] sm:$0xf]
    %v31 = vld [vmem:[%s1 + $0x34] sm:$0xf]
    %v32 = vld [vmem:[%s1 + $0x38] sm:$0xf]
    %v33 = vld [vmem:[%s1 + $0x3c] sm:$0xf]
    %v34 = vld [vmem:[%s1 + $0x40] sm:$0xf]
    %v35 = vld [vmem:[%s1 + $0x44] sm:$0xf]
    %v36 = vld [vmem:[%s1 + $0x48] sm:$0xf]
    %v37 = vld [vmem:[%s1 + $0x4c] sm:$0xf]
    %v38 = vld [vmem:[%s1 + $0x50] sm:$0xf]
    %v39 = vld [vmem:[%s1 + $0x54] sm:$0xf]
    %v40 = vld [vmem:[%s1 + $0x58] sm:$0xf]
    %v41 = vld [vmem:[%s1 + $0x5c] sm:$0xf]
    %v42 = vld [vmem:[%s1 + $0x60] sm:$0xf]
    %v43 = vld [vmem:[%s1 + $0x64] sm:$0xf]
    %v44 = vld [vmem:[%s1 + $0x68] sm:$0xf]
    %v45 = vld [vmem:[%s1 + $0x6c] sm:$0xf]
    %v46 = vld [vmem:[%s1 + $0x70] sm:$0xf]
    %v47 = vld [vmem:[%s1 + $0x74] sm:$0xf]
    %v48 = vld [vmem:[%s1 + $0x78] sm:$0xf]
    %v49 = vld [vmem:[%s1 + $0x7c] sm:$0xf]
    %v50 = vld [vmem:[%s1 + $0x80] sm:$0xf]
    %v51 = vld [vmem:[%s1 + $0x84] sm:$0xf]
    %v52 = vld [vmem:[%s1 + $0x88] sm:$0xf]
    %v53 = vld [vmem:[%s1 + $0x8c] sm:$0xf]
    %v54 = vld [vmem:[%s1 + $0x90] sm:$0xf]
    %v55 = vld [vmem:[%s1 + $0x94] sm:$0xf]
    %v56 = vld [vmem:[%s1 + $0x98] sm:$0xf]
    %v57 = vld [vmem:[%s1 + $0x9c] sm:$0xf]
    %v58 = vld [vmem:[%s1 + $0xa0] sm:$0xf]
    %v59 = vld [vmem:[%s1 + $0xa4] sm:$0xf]
    %v60 = vld [vmem:[%s1 + $0xa8] sm:$0xf]
    %v61 = vld [vmem:[%s1 + $0xac] sm:$0xf]
    %v62 = vld [vmem:[%s1 + $0xb0] sm:$0xf]
    %v63 = vld [vmem:[%s1 + $0xb4] sm:$0xf]
    %v64 = vld [vmem:[%s1 + $0xb8] sm:$0xf]
    %v65 = vld [vmem:[%s1 + $0xbc] sm:$0xf]
    %v66 = vld [vmem:[%s1 + $0xc0] sm:$0xf]
    %v67 = vld [vmem:[%s1 + $0xc4] sm:$0xf]
    %v68 = vld [vmem:[%s1 + $0xc8] sm:$0xf]
    %v69 = vld [vmem:[%s1 + $0xcc] sm:$0xf]
    %v70 = vld [vmem:[%s1 + $0xd0] sm:$0xf]
    %v71 = vld [vmem:[%s1 + $0xd4] sm:$0xf]
    %v72 = vld [vmem:[%s1 + $0xd8] sm:$0xf]
    %v73 = vld [vmem:[%s1 + $0xdc] sm:$0xf]
    %v74 = vld [vmem:[%s1 + $0xe0] sm:$0xf]
    %v75 = vld [vmem:[%s1 + $0xe4] sm:$0xf]
    %v76 = vld [vmem:[%s1 + $0xe8] sm:$0xf]
    %v77 = vld [vmem:[%s1 + $0xec] sm:$0xf]
    %v78 = vld [vmem:[%s1 + $0xf0] sm:$0xf]
    %v79 = vld [vmem:[%s1 + $0xf4] sm:$0xf]
    %v80 = vld [vmem:[%s1 + $0xf8] sm:$0xf]
    %v81 = vld [vmem:[%s1 + $0xfc] sm:$0xf]
    %v82 = vld [vmem:[%s1 + $0x100] sm:$0xf]
    %v83 = vld [vmem:[%s1 + $0x104] sm:$0xf]
    %v84 = vld [vmem:[%s1 + $0x108] sm:$0xf]
    %v85 = vld [vmem:[%s1 + $0x10c] sm:$0xf]
    %v86 = vld [vmem:[%s1 + $0x110] sm:$0xf]
    %v87 = vld [vmem:[%s1 + $0x114] sm:$0xf]
    %v88 = vld [vmem:[%s1 + $0x118] sm:$0xf]
    %v89 = vld [vmem:[%s1 + $0x11c] sm:$0xf]
    %v90 = vld [vmem:[%s1 + $0x120] sm:$0xf]
    %v91 = vld [vmem:[%s1 + $0x124] sm:$0xf]
    %v92 = vld [vmem:[%s1 + $0x128] sm:$0xf]
    %v93 = vld [vmem:[%s1 + $0x12c] sm:$0xf]
    %v94 = vld [vmem:[%s1 + $0x130] sm:$0xf]
    %v95 = vld [vmem:[%s1 + $0x134] sm:$0xf]
    %v96 = vld [vmem:[%s1 + $0x138] sm:$0xf]
    %v97 = vld [vmem:[%s1 + $0x13c] sm:$0xf]
    %v98 = vld [vmem:[%s1 + $0x140] sm:$0xf]
    %v99 = vld [vmem:[%s1 + $0x144] sm:$0xf]
    %v100 = vld [vmem:[%s1 + $0x148] sm:$0xf]
    %v101 = vld [vmem:[%s1 + $0x14c] sm:$0xf]
    %v102 = vld [vmem:[%s1 + $0x150] sm:$0xf]
    %v103 = vld [vmem:[%s1 + $0x154] sm:$0xf]
    %v104 = vld [vmem:[%s1 + $0x158] sm:$0xf]
    %v105 = vld [vmem:[%s1 + $0x15c] sm:$0xf]
    %v106 = vld [vmem:[%s1 + $0x160] sm:$0xf]
    %v107 = vld [vmem:[%s1 + $0x164] sm:$0xf]
    %v108 = vld [vmem:[%s1 + $0x168] sm:$0xf]
    %v109 = vld [vmem:[%s1 + $0x16c] sm:$0xf]
    %v110 = vld [vmem:[%s1 + $0x170] sm:$0xf]
    %v111 = vld [vmem:[%s1 + $0x174] sm:$0xf]
    %v112 = vld [vmem:[%s1 + $0x178] sm:$0xf]
    %v113 = vld [vmem:[%s1 + $0x17c] sm:$0xf]
    %v114 = vld [vmem:[%s2] sm:$0x3f]
    %v116 = vlaneseq
    %v117 = vshrl.u32 %v116, 7
    %v118 = vsub.s32 0, %v117
    %v119 = vrot.slane %v114, %v118
    %v120 = vlaneseq
    %v121 = vshrl.u32 %v120, 7
    %v122 = vsub.s32 1, %v121
    %v123 = vrot.slane %v114, %v122
    %v124 = vlaneseq
    %v125 = vshrl.u32 %v124, 7
    %v126 = vsub.s32 2, %v125
    %v127 = vrot.slane %v114, %v126
    %v128 = vlaneseq
    %v129 = vshrl.u32 %v128, 7
    %v130 = vsub.s32 3, %v129
    %v131 = vrot.slane %v114, %v130
    %v132 = vlaneseq
    %v133 = vshrl.u32 %v132, 7
    %v134 = vsub.s32 4, %v133
    %v135 = vrot.slane %v114, %v134
    %v136 = vlaneseq
    %v137 = vshrl.u32 %v136, 7
    %v138 = vsub.s32 5, %v137
    %v139 = vrot.slane %v114, %v138
    %v242 = vunpack.c.l.b16 %v18
    %v243 = vunpack.c.l.b16 %v19
    %v244 = vunpack.c.l.b16 %v20
    %v245 = vunpack.c.l.b16 %v21
    %v246 = vunpack.c.l.b16 %v22
    %v247 = vunpack.c.l.b16 %v23
    %v248 = vunpack.c.l.b16 %v24
    %v249 = vunpack.c.l.b16 %v25
    %v250 = vunpack.c.l.b16 %v26
    %v251 = vunpack.c.l.b16 %v27
    %v252 = vunpack.c.l.b16 %v28
    %v253 = vunpack.c.l.b16 %v29
    %v254 = vunpack.c.l.b16 %v30
    %v255 = vunpack.c.l.b16 %v31
    %v256 = vunpack.c.l.b16 %v32
    %v257 = vunpack.c.l.b16 %v33
    %v258 = vunpack.c.l.b16 %v34
    %v259 = vunpack.c.l.b16 %v35
    %v260 = vunpack.c.l.b16 %v36
    %v261 = vunpack.c.l.b16 %v37
    %v262 = vunpack.c.l.b16 %v38
    %v263 = vunpack.c.l.b16 %v39
    %v264 = vunpack.c.l.b16 %v40
    %v265 = vunpack.c.l.b16 %v41
    %v266 = vunpack.c.l.b16 %v42
    %v267 = vunpack.c.l.b16 %v43
    %v268 = vunpack.c.l.b16 %v44
    %v269 = vunpack.c.l.b16 %v45
    %v270 = vunpack.c.l.b16 %v46
    %v271 = vunpack.c.l.b16 %v47
    %v272 = vunpack.c.l.b16 %v48
    %v273 = vunpack.c.l.b16 %v49
    %v274 = vunpack.c.l.b16 %v50
    %v275 = vunpack.c.l.b16 %v51
    %v276 = vunpack.c.l.b16 %v52
    %v277 = vunpack.c.l.b16 %v53
    %v278 = vunpack.c.l.b16 %v54
    %v279 = vunpack.c.l.b16 %v55
    %v280 = vunpack.c.l.b16 %v56
    %v281 = vunpack.c.l.b16 %v57
    %v282 = vunpack.c.l.b16 %v58
    %v283 = vunpack.c.l.b16 %v59
    %v284 = vunpack.c.l.b16 %v60
    %v285 = vunpack.c.l.b16 %v61
    %v286 = vunpack.c.l.b16 %v62
    %v287 = vunpack.c.l.b16 %v63
    %v288 = vunpack.c.l.b16 %v64
    %v289 = vunpack.c.l.b16 %v65
    %v290 = vunpack.c.l.b16 %v66
    %v291 = vunpack.c.l.b16 %v67
    %v292 = vunpack.c.l.b16 %v68
    %v293 = vunpack.c.l.b16 %v69
    %v294 = vunpack.c.l.b16 %v70
    %v295 = vunpack.c.l.b16 %v71
    %v296 = vunpack.c.l.b16 %v72
    %v297 = vunpack.c.l.b16 %v73
    %v298 = vunpack.c.l.b16 %v74
    %v299 = vunpack.c.l.b16 %v75
    %v300 = vunpack.c.l.b16 %v76
    %v301 = vunpack.c.l.b16 %v77
    %v302 = vunpack.c.l.b16 %v78
    %v303 = vunpack.c.l.b16 %v79
    %v304 = vunpack.c.l.b16 %v80
    %v305 = vunpack.c.l.b16 %v81
    %v306 = vunpack.c.l.b16 %v82
    %v307 = vunpack.c.l.b16 %v83
    %v308 = vunpack.c.l.b16 %v84
    %v309 = vunpack.c.l.b16 %v85
    %v310 = vunpack.c.l.b16 %v86
    %v311 = vunpack.c.l.b16 %v87
    %v312 = vunpack.c.l.b16 %v88
    %v313 = vunpack.c.l.b16 %v89
    %v314 = vunpack.c.l.b16 %v90
    %v315 = vunpack.c.l.b16 %v91
    %v316 = vunpack.c.l.b16 %v92
    %v317 = vunpack.c.l.b16 %v93
    %v318 = vunpack.c.l.b16 %v94
    %v319 = vunpack.c.l.b16 %v95
    %v320 = vunpack.c.l.b16 %v96
    %v321 = vunpack.c.l.b16 %v97
    %v322 = vunpack.c.l.b16 %v98
    %v323 = vunpack.c.l.b16 %v99
    %v324 = vunpack.c.l.b16 %v100
    %v325 = vunpack.c.l.b16 %v101
    %v326 = vunpack.c.l.b16 %v102
    %v327 = vunpack.c.l.b16 %v103
    %v328 = vunpack.c.l.b16 %v104
    %v329 = vunpack.c.l.b16 %v105
    %v330 = vunpack.c.l.b16 %v106
    %v331 = vunpack.c.l.b16 %v107
    %v332 = vunpack.c.l.b16 %v108
    %v333 = vunpack.c.l.b16 %v109
    %v334 = vunpack.c.l.b16 %v110
    %v335 = vunpack.c.l.b16 %v111
    %v336 = vunpack.c.l.b16 %v112
    %v337 = vunpack.c.l.b16 %v113
    %v338 = vpack.c.b16 %v243, %v242
    %v339 = vpack.c.b16 %v245, %v244
    %v340 = vpack.c.b16 %v247, %v246
    %v341 = vpack.c.b16 %v249, %v248
    %v342 = vpack.c.b16 %v251, %v250
    %v343 = vpack.c.b16 %v253, %v252
    %v344 = vpack.c.b16 %v255, %v254
    %v345 = vpack.c.b16 %v257, %v256
    %v346 = vpack.c.b16 %v259, %v258
    %v347 = vpack.c.b16 %v261, %v260
    %v348 = vpack.c.b16 %v263, %v262
    %v349 = vpack.c.b16 %v265, %v264
    %v350 = vpack.c.b16 %v267, %v266
    %v351 = vpack.c.b16 %v269, %v268
    %v352 = vpack.c.b16 %v271, %v270
    %v353 = vpack.c.b16 %v273, %v272
    %v354 = vpack.c.b16 %v275, %v274
    %v355 = vpack.c.b16 %v277, %v276
    %v356 = vpack.c.b16 %v279, %v278
    %v357 = vpack.c.b16 %v281, %v280
    %v358 = vpack.c.b16 %v283, %v282
    %v359 = vpack.c.b16 %v285, %v284
    %v360 = vpack.c.b16 %v287, %v286
    %v361 = vpack.c.b16 %v289, %v288
    %v362 = vpack.c.b16 %v291, %v290
    %v363 = vpack.c.b16 %v293, %v292
    %v364 = vpack.c.b16 %v295, %v294
    %v365 = vpack.c.b16 %v297, %v296
    %v366 = vpack.c.b16 %v299, %v298
    %v367 = vpack.c.b16 %v301, %v300
    %v368 = vpack.c.b16 %v303, %v302
    %v369 = vpack.c.b16 %v305, %v304
    %v370 = vpack.c.b16 %v307, %v306
    %v371 = vpack.c.b16 %v309, %v308
    %v372 = vpack.c.b16 %v311, %v310
    %v373 = vpack.c.b16 %v313, %v312
    %v374 = vpack.c.b16 %v315, %v314
    %v375 = vpack.c.b16 %v317, %v316
    %v376 = vpack.c.b16 %v319, %v318
    %v377 = vpack.c.b16 %v321, %v320
    %v378 = vpack.c.b16 %v323, %v322
    %v379 = vpack.c.b16 %v325, %v324
    %v380 = vpack.c.b16 %v327, %v326
    %v381 = vpack.c.b16 %v329, %v328
    %v382 = vpack.c.b16 %v331, %v330
    %v383 = vpack.c.b16 %v333, %v332
    %v384 = vpack.c.b16 %v335, %v334
    %v385 = vpack.c.b16 %v337, %v336
    %vm386 = vcmask 523264
    %v388 = vsel %vm386, %v17, 0
    %v391 = vsel %vm386, %v338, 0
    %v394 = vsel %vm386, %v339, 0
    %v397 = vsel %vm386, %v340, 0
    %v400 = vsel %vm386, %v341, 0
    %v403 = vsel %vm386, %v342, 0
    %v406 = vsel %vm386, %v343, 0
    %v409 = vsel %vm386, %v344, 0
    %v412 = vsel %vm386, %v345, 0
    %v415 = vsel %vm386, %v346, 0
    %v418 = vsel %vm386, %v347, 0
    %v421 = vsel %vm386, %v348, 0
    %v424 = vsel %vm386, %v349, 0
    %v427 = vsel %vm386, %v350, 0
    %v430 = vsel %vm386, %v351, 0
    %v433 = vsel %vm386, %v352, 0
    %v436 = vsel %vm386, %v353, 0
    %v439 = vsel %vm386, %v354, 0
    %v442 = vsel %vm386, %v355, 0
    %v445 = vsel %vm386, %v356, 0
    %v448 = vsel %vm386, %v357, 0
    %v451 = vsel %vm386, %v358, 0
    %v454 = vsel %vm386, %v359, 0
    %v457 = vsel %vm386, %v360, 0
    %v460 = vsel %vm386, %v361, 0
    %v463 = vsel %vm386, %v362, 0
    %v466 = vsel %vm386, %v363, 0
    %v469 = vsel %vm386, %v364, 0
    %v472 = vsel %vm386, %v365, 0
    %v475 = vsel %vm386, %v366, 0
    %v478 = vsel %vm386, %v367, 0
    %v481 = vsel %vm386, %v368, 0
    %v484 = vsel %vm386, %v369, 0
    %v487 = vsel %vm386, %v370, 0
    %v490 = vsel %vm386, %v371, 0
    %v493 = vsel %vm386, %v372, 0
    %v496 = vsel %vm386, %v373, 0
    %v499 = vsel %vm386, %v374, 0
    %v502 = vsel %vm386, %v375, 0
    %v505 = vsel %vm386, %v376, 0
    %v508 = vsel %vm386, %v377, 0
    %v511 = vsel %vm386, %v378, 0
    %v514 = vsel %vm386, %v379, 0
    %v517 = vsel %vm386, %v380, 0
    %v520 = vsel %vm386, %v381, 0
    %v523 = vsel %vm386, %v382, 0
    %v526 = vsel %vm386, %v383, 0
    %v529 = vsel %vm386, %v384, 0
    %v532 = vsel %vm386, %v385, 0
    %534 = vmatprep.subr.bf16.mxu0 0
    %535 = vmatpush1.bf16.xpose.msra.mxu0 %v391
    %536 = vmatprep.subr.bf16.mxu0 0
    %537 = vmatpush1.bf16.xpose.msra.mxu0 %v394
    %538 = vmatprep.subr.bf16.mxu0 0
    %539 = vmatpush1.bf16.xpose.msra.mxu0 %v397
    %540 = vmatprep.subr.bf16.mxu0 0
    %541 = vmatpush1.bf16.xpose.msra.mxu0 %v400
    %542 = vmatprep.subr.bf16.mxu0 0
    %543 = vmatpush1.bf16.xpose.msra.mxu0 %v403
    %544 = vmatprep.subr.bf16.mxu0 0
    %545 = vmatpush1.bf16.xpose.msra.mxu0 %v406
    %546 = vmatprep.subr.bf16.mxu0 0
    %547 = vmatpush1.bf16.xpose.msra.mxu0 %v409
    %548 = vmatprep.subr.bf16.mxu0 0
    %549 = vmatpush1.bf16.xpose.msra.mxu0 %v412
    %550 = vmatprep.subr.bf16.mxu0 0
    %551 = vmatpush1.bf16.xpose.msra.mxu0 %v415
    %552 = vmatprep.subr.bf16.mxu0 0
    %553 = vmatpush1.bf16.xpose.msra.mxu0 %v418
    %554 = vmatprep.subr.bf16.mxu0 0
    %555 = vmatpush1.bf16.xpose.msra.mxu0 %v421
    %556 = vmatprep.subr.bf16.mxu0 0
    %557 = vmatpush1.bf16.xpose.msra.mxu0 %v424
    %558 = vmatprep.subr.bf16.mxu0 0
    %559 = vmatpush1.bf16.xpose.msra.mxu0 %v427
    %560 = vmatprep.subr.bf16.mxu0 0
    %561 = vmatpush1.bf16.xpose.msra.mxu0 %v430
    %562 = vmatprep.subr.bf16.mxu0 0
    %563 = vmatpush1.bf16.xpose.msra.mxu0 %v433
    %564 = vmatprep.subr.bf16.mxu0 0
    %565 = vmatpush1.bf16.xpose.msra.mxu0 %v436
    %566 = vmatprep.mubr.bf16.mxu0 0
    %567 = vmatmul.mubr.bf16.gmra.mrb[0].mxu0 %v388
    %v568 = vpop.f32.mrb[0].mxu0
    %v569 = vadd.f32 %v119, %v568
    %v570 = vpop.f32.mrb[0].mxu0
    %v571 = vadd.f32 %v123, %v570
    %v572 = vpop.f32.mrb[0].mxu0
    %v573 = vpop.f32.mrb[0].mxu0
    %574 = vdwg.mxu0
    %575 = vmatprep.subr.bf16.mxu0 0
    %576 = vmatpush1.bf16.xpose.msra.mxu0 %v439
    %577 = vmatprep.subr.bf16.mxu0 0
    %578 = vmatpush1.bf16.xpose.msra.mxu0 %v442
    %579 = vmatprep.subr.bf16.mxu0 0
    %580 = vmatpush1.bf16.xpose.msra.mxu0 %v445
    %581 = vmatprep.subr.bf16.mxu0 0
    %582 = vmatpush1.bf16.xpose.msra.mxu0 %v448
    %583 = vmatprep.subr.bf16.mxu0 0
    %584 = vmatpush1.bf16.xpose.msra.mxu0 %v451
    %585 = vmatprep.subr.bf16.mxu0 0
    %586 = vmatpush1.bf16.xpose.msra.mxu0 %v454
    %587 = vmatprep.subr.bf16.mxu0 0
    %588 = vmatpush1.bf16.xpose.msra.mxu0 %v457
    %589 = vmatprep.subr.bf16.mxu0 0
    %590 = vmatpush1.bf16.xpose.msra.mxu0 %v460
    %591 = vmatprep.subr.bf16.mxu0 0
    %592 = vmatpush1.bf16.xpose.msra.mxu0 %v463
    %593 = vmatprep.subr.bf16.mxu0 0
    %594 = vmatpush1.bf16.xpose.msra.mxu0 %v466
    %595 = vmatprep.subr.bf16.mxu0 0
    %596 = vmatpush1.bf16.xpose.msra.mxu0 %v469
    %597 = vmatprep.subr.bf16.mxu0 0
    %598 = vmatpush1.bf16.xpose.msra.mxu0 %v472
    %599 = vmatprep.subr.bf16.mxu0 0
    %600 = vmatpush1.bf16.xpose.msra.mxu0 %v475
    %601 = vmatprep.subr.bf16.mxu0 0
    %602 = vmatpush1.bf16.xpose.msra.mxu0 %v478
    %603 = vmatprep.subr.bf16.mxu0 0
    %604 = vmatpush1.bf16.xpose.msra.mxu0 %v481
    %605 = vmatprep.subr.bf16.mxu0 0
    %606 = vmatpush1.bf16.xpose.msra.mxu0 %v484
    %607 = vmatprep.mubr.bf16.mxu0 0
    %608 = vmatmul.mubr.bf16.gmra.mrb[0].mxu0 %v388
    %v609 = vpop.f32.mrb[0].mxu0
    %v610 = vadd.f32 %v127, %v609
    %v611 = vpop.f32.mrb[0].mxu0
    %v612 = vadd.f32 %v131, %v611
    %v613 = vpop.f32.mrb[0].mxu0
    %v614 = vpop.f32.mrb[0].mxu0
    %615 = vdwg.mxu0
    %616 = vmatprep.subr.bf16.mxu0 0
    %617 = vmatpush1.bf16.xpose.msra.mxu0 %v487
    %618 = vmatprep.subr.bf16.mxu0 0
    %619 = vmatpush1.bf16.xpose.msra.mxu0 %v490
    %620 = vmatprep.subr.bf16.mxu0 0
    %621 = vmatpush1.bf16.xpose.msra.mxu0 %v493
    %622 = vmatprep.subr.bf16.mxu0 0
    %623 = vmatpush1.bf16.xpose.msra.mxu0 %v496
    %624 = vmatprep.subr.bf16.mxu0 0
    %625 = vmatpush1.bf16.xpose.msra.mxu0 %v499
    %626 = vmatprep.subr.bf16.mxu0 0
    %627 = vmatpush1.bf16.xpose.msra.mxu0 %v502
    %628 = vmatprep.subr.bf16.mxu0 0
    %629 = vmatpush1.bf16.xpose.msra.mxu0 %v505
    %630 = vmatprep.subr.bf16.mxu0 0
    %631 = vmatpush1.bf16.xpose.msra.mxu0 %v508
    %632 = vmatprep.subr.bf16.mxu0 0
    %633 = vmatpush1.bf16.xpose.msra.mxu0 %v511
    %634 = vmatprep.subr.bf16.mxu0 0
    %635 = vmatpush1.bf16.xpose.msra.mxu0 %v514
    %636 = vmatprep.subr.bf16.mxu0 0
    %637 = vmatpush1.bf16.xpose.msra.mxu0 %v517
    %638 = vmatprep.subr.bf16.mxu0 0
    %639 = vmatpush1.bf16.xpose.msra.mxu0 %v520
    %640 = vmatprep.subr.bf16.mxu0 0
    %641 = vmatpush1.bf16.xpose.msra.mxu0 %v523
    %642 = vmatprep.subr.bf16.mxu0 0
    %643 = vmatpush1.bf16.xpose.msra.mxu0 %v526
    %644 = vmatprep.subr.bf16.mxu0 0
    %645 = vmatpush1.bf16.xpose.msra.mxu0 %v529
    %646 = vmatprep.subr.bf16.mxu0 0
    %647 = vmatpush1.bf16.xpose.msra.mxu0 %v532
    %648 = vmatprep.mubr.bf16.mxu0 0
    %649 = vmatmul.mubr.bf16.gmra.mrb[0].mxu0 %v388
    %v650 = vpop.f32.mrb[0].mxu0
    %v651 = vadd.f32 %v135, %v650
    %v652 = vpop.f32.mrb[0].mxu0
    %v653 = vadd.f32 %v139, %v652
    %v654 = vpop.f32.mrb[0].mxu0
    %v655 = vpop.f32.mrb[0].mxu0
    %656 = vdwg.mxu0
    %v657 = vxor.u32 %v569, 2147483648
    %v658 = vxor.u32 %v571, 2147483648
    %v659 = vxor.u32 %v610, 2147483648
    %v660 = vxor.u32 %v612, 2147483648
    %v661 = vxor.u32 %v651, 2147483648
    %v662 = vxor.u32 %v653, 2147483648
    %v663 = vmul.f32 %v657, 1.442695
    %v664 = vpow.pop %v663
    %v665 = vmul.f32 %v658, 1.442695
    %v666 = vpow.pop %v665
    %v667 = vmul.f32 %v659, 1.442695
    %v668 = vpow.pop %v667
    %v669 = vmul.f32 %v660, 1.442695
    %v670 = vpow.pop %v669
    %v671 = vmul.f32 %v661, 1.442695
    %v672 = vpow.pop %v671
    %v673 = vmul.f32 %v662, 1.442695
    %v674 = vpow.pop %v673
    %v675 = vadd.f32 %v664, 1.0
    %v676 = vadd.f32 %v666, 1.0
    %v677 = vadd.f32 %v668, 1.0
    %v678 = vadd.f32 %v670, 1.0
    %v679 = vadd.f32 %v672, 1.0
    %v680 = vadd.f32 %v674, 1.0
    %v681 = vrcp.pop %v675
    %v682 = vmul.f32 1.0, %v681
    %v683 = vrcp.pop %v676
    %v684 = vmul.f32 1.0, %v683
    %v685 = vrcp.pop %v677
    %v686 = vmul.f32 1.0, %v685
    %v687 = vrcp.pop %v678
    %v688 = vmul.f32 1.0, %v687
    %v689 = vrcp.pop %v679
    %v690 = vmul.f32 1.0, %v689
    %v691 = vrcp.pop %v680
    %v692 = vmul.f32 1.0, %v691
    %693 = vst [vmem:[#allocation2] sm:$0xff] %v682
    %694 = vst [vmem:[#allocation2 + $0x8] sm:$0xff] %v684
    %695 = vst [vmem:[#allocation2 + $0x10] sm:$0xff] %v686
    %696 = vst [vmem:[#allocation2 + $0x18] sm:$0xff] %v688
    %697 = vst [vmem:[#allocation2 + $0x20] sm:$0xff] %v690
    %698 = vst [vmem:[#allocation2 + $0x28] sm:$0xff] %v692
    // Predicated region
    $region14: #{control_tensor_generator.1} parent=1 // pred_check
      _
    $region15: #{control_tensor_generator.1} parent=1 // pred_check_branch
      %700 = sbr.rel (0) target = $region17
    $region16: #{control_tensor_generator.1} parent=1 // pred_region
      %s702 = ssub.s32 768, 768
      %703 = vsyncadd [#allocation3], %s702
      %s705 = sshll.u32 [#allocation2], 4
      %s706 = int_to_ptr.vmem [resolvable:$true] %s705
      %708 = dma.vmem_to_hbm [thread:$0]  %s706, 768, %s3, [#allocation3]
    $region17: #{control_tensor_generator.1} parent=1 // pred_fallthru
      _
    // Predicated region
    $region18: #{control_tensor_generator.1} parent=1 // pred_check
      _
    $region19: #{control_tensor_generator.1} parent=1 // pred_check_branch
      %710 = sbr.rel (0) target = $region21
    $region20: #{control_tensor_generator.1} parent=1 // pred_region
      %711 = dma.done [#allocation3], 768
    $region21: #{control_tensor_generator.1} parent=1 // pred_fallthru
      _
    %712 = vsyncpa [#allocation3], 1

</llo_original>
